<compile_context>
chip_gen: v6e
topology: v6e:2x2x1
jax: 0.10.0
libtpu: 0.0.40
codegen_flags: <defaults>
</compile_context>

<pallas_src>
import jax
import jax.numpy as jnp
from jax.experimental import pallas as pl
from jax.experimental.pallas import tpu as pltpu

_LANES = 128


def _round_up(v, m):
    return ((v + m - 1) // m) * m


# ----------------------------- Pallas kernel ------------------------------- #
def _build_kernel(*, bt, n_nodes, n_pad, f_pad, hidden, lanes, compute_dtype):
    rows = bt * n_pad
    inv_n = 1.0 / float(n_nodes)
    inv_h = 1.0 / float(hidden)
    cdt = compute_dtype

    def kernel(x_ref, a_ref, w_ref, v_ref, o_ref):
        x = x_ref[0]                                       # [rows, f_pad]   (cdt)
        a = a_ref[0]                                       # [rows, rows]    (cdt, block-diag)
        # Packed weight slab (8-aligned row offsets): [0:f_pad)=w1, then wc, then w2.
        w1 = w_ref[0:f_pad, :]
        wc = w_ref[f_pad:f_pad + hidden, :]
        w2 = w_ref[f_pad + hidden:f_pad + 2 * hidden, :]
        # Packed vector slab rows: b1, bc, gamma, beta, b2, ws, bs(broadcast row), pad.
        b1, bc = v_ref[0:1, :], v_ref[1:2, :]
        gamma, beta = v_ref[2:3, :], v_ref[3:4, :]
        b2, ws, bs = v_ref[4:5, :], v_ref[5:6, :], v_ref[6:7, :]

        # --- GCNConv 1: A_hat @ (X W1) + b1 ; ReLU  (dropout p=0.1 -> identity) ---
        h = jnp.dot(x, w1, preferred_element_type=jnp.float32)
        h = jnp.dot(a, h.astype(cdt), preferred_element_type=jnp.float32) + b1
        h = jnp.maximum(h, 0.0)

        # --- coop_specific: Linear(H, H) ---
        h = jnp.dot(h.astype(cdt), wc, preferred_element_type=jnp.float32) + bc

        # --- coop_norm: LayerNorm over features (eps = 1e-5), then ReLU ---
        mu = jnp.mean(h, axis=-1, keepdims=True)
        var = jnp.mean((h - mu) * (h - mu), axis=-1, keepdims=True)
        h = (h - mu) * jax.lax.rsqrt(var + 1e-5) * gamma + beta
        h = jnp.maximum(h, 0.0)

        # --- GCNConv 2: A_hat @ (H W2) + b2 ; ReLU ---
        h = jnp.dot(h.astype(cdt), w2, preferred_element_type=jnp.float32)
        h = jnp.dot(a, h.astype(cdt), preferred_element_type=jnp.float32) + b2
        h = jnp.maximum(h, 0.0)

        # --- fused global-mean-pool + score head ---
        # Pooling matrix P[g, r] = 1 iff row r is a real (non-padded) node of graph g.
        g = jax.lax.broadcasted_iota(jnp.int32, (bt, rows), 0)
        r = jax.lax.broadcasted_iota(jnp.int32, (bt, rows), 1)
        lo = g * n_pad
        p = jnp.where((r >= lo) & (r < lo + n_nodes), 1.0, 0.0).astype(cdt)
        pooled = jnp.dot(p, h.astype(cdt), preferred_element_type=jnp.float32)  # [bt, H]
        # score = mean_pool @ ws + bs, with bs folded as a full broadcast row (bs/H per lane).
        t = pooled * inv_n * ws + bs * inv_h
        score = jnp.sum(t, axis=-1, keepdims=True)         # [bt, 1]
        # Lane-dense store: one unmasked (bt, 128) slab per grid step.
        o_ref[0] = jnp.broadcast_to(score, (bt, lanes))

    return kernel


def _pack_params(params, f_pad, compute_dtype):
    f_in, hidden = params["w1"].shape
    w1p = jnp.pad(params["w1"].astype(jnp.float32), ((0, f_pad - f_in), (0, 0)))
    w_slab = jnp.concatenate(
        [w1p, params["wc"], params["w2"]], axis=0).astype(compute_dtype)
    bs_row = jnp.broadcast_to(params["bs"].reshape(1, 1), (1, hidden))
    v_slab = jnp.concatenate(
        [params["b1"], params["bc"], params["gamma"], params["beta"],
         params["b2"], params["ws"].reshape(1, hidden), bs_row,
         jnp.zeros((1, hidden), jnp.float32)], axis=0).astype(jnp.float32)
    return w_slab, v_slab


def _pick_bt(batch, n_pad, target_rows=256):
    """Graphs per grid step: fill ~256 MXU rows but keep >= 2 grid steps when possible."""
    bt = max(1, min(batch, target_rows // max(n_pad, 1)))
    if bt >= batch and batch > 1:
        bt = (batch + 1) // 2          # >= 2 parallel steps for v7x's 2 TensorCores
    return bt


def coop_expert_pallas(x, a_hat, params, *, compute_dtype=jnp.bfloat16):
    """x: [B, N, F], a_hat: [B, N, N] (normalized adjacency) -> scores [B, 1]."""
    batch, n_nodes, f_in = x.shape
    hidden = params["w1"].shape[1]
    assert hidden % 8 == 0, "hidden_channels must be a multiple of 8"
    n_pad = _round_up(n_nodes, 8)
    f_pad = _round_up(f_in, 8)
    bt = _pick_bt(batch, n_pad)
    nb = -(-batch // bt)
    b_pad = nb * bt
    rows = bt * n_pad

    x = jnp.pad(x.astype(jnp.float32),
                ((0, b_pad - batch), (0, n_pad - n_nodes), (0, f_pad - f_in)))
    a = jnp.pad(a_hat.astype(jnp.float32),
                ((0, b_pad - batch), (0, n_pad - n_nodes), (0, n_pad - n_nodes)))
    # Block-diagonal adjacency per grid step: [nb, rows, rows].
    a4 = a.reshape(nb, bt, n_pad, n_pad)
    eye = jnp.eye(bt, dtype=jnp.float32)
    a_bd = jnp.einsum("gh,bgnm->bgnhm", eye, a4).reshape(nb, rows, rows).astype(compute_dtype)
    x_blk = x.reshape(nb, rows, f_pad).astype(compute_dtype)

    w_slab, v_slab = _pack_params(params, f_pad, compute_dtype)

    kernel = _build_kernel(bt=bt, n_nodes=n_nodes, n_pad=n_pad, f_pad=f_pad,
                           hidden=hidden, lanes=_LANES, compute_dtype=compute_dtype)

    item = jnp.dtype(compute_dtype).itemsize
    blk_bytes = rows * f_pad * item + rows * rows * item + bt * _LANES * 4
    slab_bytes = w_slab.size * item + v_slab.size * 4
    vmem_limit = int(min(32 << 20, max(8 << 20, 8 * blk_bytes + 2 * slab_bytes)))

    flops = 2 * b_pad * (n_pad * f_pad * hidden + 2 * n_pad * n_pad * hidden
                         + 2 * n_pad * hidden * hidden + n_pad * hidden)
    bytes_accessed = (x_blk.size + a_bd.size + w_slab.size) * item \
                     + v_slab.size * 4 + nb * bt * _LANES * 4

    out = pl.pallas_call(
        kernel,
        out_shape=jax.ShapeDtypeStruct((nb, bt, _LANES), jnp.float32),
        grid=(nb,),
        in_specs=[
            pl.BlockSpec((1, rows, f_pad), lambda b: (b, 0, 0)),
            pl.BlockSpec((1, rows, rows), lambda b: (b, 0, 0)),
            pl.BlockSpec((f_pad + 2 * hidden, hidden), lambda b: (0, 0)),  # resident
            pl.BlockSpec((8, hidden), lambda b: (0, 0)),                   # resident
        ],
        out_specs=pl.BlockSpec((1, bt, _LANES), lambda b: (b, 0, 0)),
        compiler_params=pltpu.CompilerParams(
            dimension_semantics=("parallel",),
            vmem_limit_bytes=vmem_limit),
        cost_estimate=pl.CostEstimate(
            flops=int(flops),
            transcendentals=int(b_pad * n_pad),
            bytes_accessed=int(bytes_accessed)),
    )(x_blk, a_bd, w_slab, v_slab)
    return out.reshape(b_pad, _LANES)[:batch, :1]          # [B, 1]


# ------------------------------- JAX glue ----------------------------------- #
def edge_nn(edge_attr, we, be):
    """nn.Sequential(Linear(8, 1), Sigmoid()).view(-1) -> [E]."""
    return jax.nn.sigmoid(edge_attr @ we + be).reshape(-1)


def gcn_norm_dense(edge_index, edge_weight, num_nodes):
    """Dense A_hat with self-loops and symmetric normalization (GCNConv gcn_norm)."""
    src, dst = edge_index[0], edge_index[1]
    loop = jnp.arange(num_nodes, dtype=src.dtype)
    src = jnp.concatenate([src, loop])
    dst = jnp.concatenate([dst, loop])
    w = jnp.concatenate(
        [edge_weight, jnp.ones((num_nodes,), dtype=edge_weight.dtype)])
    deg = jnp.zeros((num_nodes,), dtype=edge_weight.dtype).at[dst].add(w)
    dis = jnp.where(deg > 0, jax.lax.rsqrt(deg), 0.0)
    norm = dis[src] * w * dis[dst]
    a = jnp.zeros((num_nodes, num_nodes), dtype=edge_weight.dtype)
    a = a.at[dst, src].add(norm)            # out[target] += norm * x[source]
    return a


def coop_expert_reference(x, a_hat, params, matmul_dtype=jnp.float32):
    """Pure-JAX single-graph reference (matmul operands cast to matmul_dtype, f32 acc)."""
    def dot(u, v):
        return jnp.dot(u.astype(matmul_dtype), v.astype(matmul_dtype),
                       preferred_element_type=jnp.float32)
    h = dot(a_hat, dot(x, params["w1"])) + params["b1"]
    h = jnp.maximum(h, 0.0)
    h = dot(h, params["wc"]) + params["bc"]
    mu = jnp.mean(h, axis=-1, keepdims=True)
    var = jnp.mean((h - mu) ** 2, axis=-1, keepdims=True)
    h = (h - mu) * jax.lax.rsqrt(var + 1e-5) * params["gamma"] + params["beta"]
    h = jnp.maximum(h, 0.0)
    h = dot(a_hat, dot(h, params["w2"])) + params["b2"]
    h = jnp.maximum(h, 0.0)
    pooled = jnp.mean(h, axis=0, keepdims=True)
    return dot(pooled, params["ws"]) + params["bs"]


def init_params(key, num_node_features, hidden):
    ks = jax.random.split(key, 8)
    s = 0.1
    return {
        # GCNConv1 / GCNConv2 weights (stored as [in, out]) + biases [1, out]
        "w1": s * jax.random.normal(ks[0], (num_node_features, hidden), jnp.float32),
        "b1": s * jax.random.normal(ks[1], (1, hidden), jnp.float32),
        "w2": s * jax.random.normal(ks[2], (hidden, hidden), jnp.float32),
        "b2": s * jax.random.normal(ks[3], (1, hidden), jnp.float32),
        # coop_specific Linear(hidden, hidden)
        "wc": s * jax.random.normal(ks[4], (hidden, hidden), jnp.float32),
        "bc": s * jax.random.normal(ks[5], (1, hidden), jnp.float32),
        # coop_norm LayerNorm(hidden): default init gamma=1, beta=0
        "gamma": jnp.ones((1, hidden), jnp.float32),
        "beta": jnp.zeros((1, hidden), jnp.float32),
        # score Linear(hidden, 1)
        "ws": s * jax.random.normal(ks[6], (hidden, 1), jnp.float32),
        "bs": s * jax.random.normal(ks[7], (1, 1), jnp.float32),
        # edge_nn Linear(8, 1)
        "we": s * jax.random.normal(jax.random.fold_in(key, 100), (8, 1), jnp.float32),
        "be": jnp.zeros((1,), jnp.float32),
    }


if __name__ == "__main__":
    B, N, F_IN, H, E = 8, 8, 16, 32, 16     # graphs, nodes, node feats, hidden, edges
    key = jax.random.PRNGKey(0)
    kx, ka, ke, kp = jax.random.split(key, 4)

    x = jax.random.normal(kx, (B, N, F_IN), jnp.float32)
    edge_attr = jax.random.normal(ka, (B, E, 8), jnp.float32)
    edge_index = jax.random.randint(ke, (B, 2, E), 0, N, dtype=jnp.int32)
    params = init_params(kp, F_IN, H)

    # Glue: per-graph edge MLP -> edge weights -> dense normalized adjacency.
    edge_weight = jax.vmap(lambda ea: edge_nn(ea, params["we"], params["be"]))(edge_attr)
    a_hat = jax.vmap(lambda ei, ew: gcn_norm_dense(ei, ew, N))(edge_index, edge_weight)

    # f32 path: tight numerical check against the pure-JAX reference.
    score_f32 = coop_expert_pallas(x, a_hat, params, compute_dtype=jnp.float32)
    jax.block_until_ready(score_f32)
    ref_f32 = jax.vmap(lambda xb, ab: coop_expert_reference(xb, ab, params))(x, a_hat)
    ref_f32 = ref_f32.reshape(B, 1)
    assert score_f32.shape == (B, 1)
    assert jnp.allclose(score_f32, ref_f32, atol=1e-4, rtol=1e-4), (score_f32, ref_f32)

    # bf16 MXU path (default): compare against a bf16-operand / f32-accumulate reference.
    score_bf16 = coop_expert_pallas(x, a_hat, params)
    jax.block_until_ready(score_bf16)
    ref_bf16 = jax.vmap(lambda xb, ab: coop_expert_reference(
        xb, ab, params, matmul_dtype=jnp.bfloat16))(x, a_hat).reshape(B, 1)
    assert score_bf16.shape == (B, 1)
    assert jnp.allclose(score_bf16, ref_bf16, atol=1e-2, rtol=1e-2), (score_bf16, ref_bf16)

    print("KERNEL_OK")
</pallas_src>

<mosaic_0001>
module attributes {stable_mosaic.version = 11 : i64} {
  func.func @kernel(%arg0: i32, %arg1: memref<1x32x16xf32, #tpu.memory_space<vmem>>, %arg2: memref<1x32x32xf32, #tpu.memory_space<vmem>>, %arg3: memref<80x32xf32, #tpu.memory_space<vmem>>, %arg4: memref<8x32xf32, #tpu.memory_space<vmem>>, %arg5: memref<1x4x128xf32, #tpu.memory_space<vmem>>) attributes {dimension_semantics = [#tpu.dimension_semantics<parallel>], iteration_bounds = array<i64: 2>, scalar_prefetch = 0 : i64, scratch_operands = 0 : i64, tpu.core_type = #tpu.core_type<tc>, window_params = [{transform_indices = @transform_0, window_bounds = array<i64: 1, 32, 16>}, {transform_indices = @transform_1, window_bounds = array<i64: 1, 32, 32>}, {pipeline_mode = #tpu.pipeline_mode<synchronous>, transform_indices = @transform_2, window_bounds = array<i64: 80, 32>}, {pipeline_mode = #tpu.pipeline_mode<synchronous>, transform_indices = @transform_3, window_bounds = array<i64: 8, 32>}, {transform_indices = @transform_4, window_bounds = array<i64: 1, 4, 128>}]} {
    %c0 = arith.constant 0 : index
    %c0_0 = arith.constant 0 : index
    %c0_1 = arith.constant 0 : index
    %0 = vector.load %arg1[%c0, %c0_0, %c0_1] : memref<1x32x16xf32, #tpu.memory_space<vmem>>, vector<1x32x16xf32>
    %1 = vector.shape_cast %0 : vector<1x32x16xf32> to vector<32x16xf32>
    %c0_2 = arith.constant 0 : index
    %c0_3 = arith.constant 0 : index
    %c0_4 = arith.constant 0 : index
    %2 = vector.load %arg2[%c0_2, %c0_3, %c0_4] : memref<1x32x32xf32, #tpu.memory_space<vmem>>, vector<1x32x32xf32>
    %3 = vector.shape_cast %2 : vector<1x32x32xf32> to vector<32x32xf32>
    %c0_5 = arith.constant 0 : index
    %c0_6 = arith.constant 0 : index
    %4 = vector.load %arg3[%c0_5, %c0_6] : memref<80x32xf32, #tpu.memory_space<vmem>>, vector<16x32xf32>
    %c16 = arith.constant 16 : index
    %c0_7 = arith.constant 0 : index
    %5 = vector.load %arg3[%c16, %c0_7] : memref<80x32xf32, #tpu.memory_space<vmem>>, vector<32x32xf32>
    %c48 = arith.constant 48 : index
    %c0_8 = arith.constant 0 : index
    %6 = vector.load %arg3[%c48, %c0_8] : memref<80x32xf32, #tpu.memory_space<vmem>>, vector<32x32xf32>
    %c0_9 = arith.constant 0 : index
    %c0_10 = arith.constant 0 : index
    %7 = vector.load %arg4[%c0_9, %c0_10] : memref<8x32xf32, #tpu.memory_space<vmem>>, vector<1x32xf32>
    %c1 = arith.constant 1 : index
    %c0_11 = arith.constant 0 : index
    %8 = vector.load %arg4[%c1, %c0_11] : memref<8x32xf32, #tpu.memory_space<vmem>>, vector<1x32xf32>
    %c2 = arith.constant 2 : index
    %c0_12 = arith.constant 0 : index
    %9 = vector.load %arg4[%c2, %c0_12] : memref<8x32xf32, #tpu.memory_space<vmem>>, vector<1x32xf32>
    %c3 = arith.constant 3 : index
    %c0_13 = arith.constant 0 : index
    %10 = vector.load %arg4[%c3, %c0_13] : memref<8x32xf32, #tpu.memory_space<vmem>>, vector<1x32xf32>
    %c4 = arith.constant 4 : index
    %c0_14 = arith.constant 0 : index
    %11 = vector.load %arg4[%c4, %c0_14] : memref<8x32xf32, #tpu.memory_space<vmem>>, vector<1x32xf32>
    %c5 = arith.constant 5 : index
    %c0_15 = arith.constant 0 : index
    %12 = vector.load %arg4[%c5, %c0_15] : memref<8x32xf32, #tpu.memory_space<vmem>>, vector<1x32xf32>
    %c6 = arith.constant 6 : index
    %c0_16 = arith.constant 0 : index
    %13 = vector.load %arg4[%c6, %c0_16] : memref<8x32xf32, #tpu.memory_space<vmem>>, vector<1x32xf32>
    %cst = arith.constant dense<0.000000e+00> : vector<32x32xf32>
    %14 = tpu.matmul %1, %4, %cst {dimension_numbers = #tpu.dot_dimension_numbers<[1], [0], [0], [1], [0, 0, 1, 1], [], []>} : vector<32x16xf32>, vector<16x32xf32>, vector<32x32xf32> -> vector<32x32xf32>
    %cst_17 = arith.constant dense<0.000000e+00> : vector<32x32xf32>
    %15 = tpu.matmul %3, %14, %cst_17 {dimension_numbers = #tpu.dot_dimension_numbers<[1], [0], [0], [1], [0, 0, 1, 1], [], []>} : vector<32x32xf32>, vector<32x32xf32>, vector<32x32xf32> -> vector<32x32xf32>
    %16 = vector.broadcast %7 : vector<1x32xf32> to vector<32x32xf32>
    %17 = arith.addf %15, %16 : vector<32x32xf32>
    %cst_18 = arith.constant 0.000000e+00 : f32
    %18 = vector.broadcast %cst_18 : f32 to vector<32x32xf32>
    %19 = arith.maximumf %17, %18 : vector<32x32xf32>
    %cst_19 = arith.constant dense<0.000000e+00> : vector<32x32xf32>
    %20 = tpu.matmul %19, %5, %cst_19 {dimension_numbers = #tpu.dot_dimension_numbers<[1], [0], [0], [1], [0, 0, 1, 1], [], []>} : vector<32x32xf32>, vector<32x32xf32>, vector<32x32xf32> -> vector<32x32xf32>
    %21 = vector.broadcast %8 : vector<1x32xf32> to vector<32x32xf32>
    %22 = arith.addf %20, %21 : vector<32x32xf32>
    %cst_20 = arith.constant dense<0.000000e+00> : vector<32xf32>
    %23 = vector.multi_reduction <add>, %22, %cst_20 [1] : vector<32x32xf32> to vector<32xf32>
    %24 = vector.shape_cast %23 : vector<32xf32> to vector<32x1xf32>
    %cst_21 = arith.constant 3.200000e+01 : f32
    %25 = vector.broadcast %cst_21 : f32 to vector<32x1xf32>
    %26 = arith.divf %24, %25 : vector<32x1xf32>
    %27 = vector.broadcast %26 : vector<32x1xf32> to vector<32x32xf32>
    %28 = arith.subf %22, %27 : vector<32x32xf32>
    %29 = vector.broadcast %26 : vector<32x1xf32> to vector<32x32xf32>
    %30 = arith.subf %22, %29 : vector<32x32xf32>
    %31 = arith.mulf %28, %30 : vector<32x32xf32>
    %cst_22 = arith.constant dense<0.000000e+00> : vector<32xf32>
    %32 = vector.multi_reduction <add>, %31, %cst_22 [1] : vector<32x32xf32> to vector<32xf32>
    %33 = vector.shape_cast %32 : vector<32xf32> to vector<32x1xf32>
    %cst_23 = arith.constant 3.200000e+01 : f32
    %34 = vector.broadcast %cst_23 : f32 to vector<32x1xf32>
    %35 = arith.divf %33, %34 : vector<32x1xf32>
    %36 = vector.broadcast %26 : vector<32x1xf32> to vector<32x32xf32>
    %37 = arith.subf %22, %36 : vector<32x32xf32>
    %cst_24 = arith.constant 9.99999974E-6 : f32
    %38 = vector.broadcast %cst_24 : f32 to vector<32x1xf32>
    %39 = arith.addf %35, %38 : vector<32x1xf32>
    %40 = math.rsqrt %39 : vector<32x1xf32>
    %41 = vector.broadcast %40 : vector<32x1xf32> to vector<32x32xf32>
    %42 = arith.mulf %37, %41 : vector<32x32xf32>
    %43 = vector.broadcast %9 : vector<1x32xf32> to vector<32x32xf32>
    %44 = arith.mulf %42, %43 : vector<32x32xf32>
    %45 = vector.broadcast %10 : vector<1x32xf32> to vector<32x32xf32>
    %46 = arith.addf %44, %45 : vector<32x32xf32>
    %cst_25 = arith.constant 0.000000e+00 : f32
    %47 = vector.broadcast %cst_25 : f32 to vector<32x32xf32>
    %48 = arith.maximumf %46, %47 : vector<32x32xf32>
    %cst_26 = arith.constant dense<0.000000e+00> : vector<32x32xf32>
    %49 = tpu.matmul %48, %6, %cst_26 {dimension_numbers = #tpu.dot_dimension_numbers<[1], [0], [0], [1], [0, 0, 1, 1], [], []>} : vector<32x32xf32>, vector<32x32xf32>, vector<32x32xf32> -> vector<32x32xf32>
    %cst_27 = arith.constant dense<0.000000e+00> : vector<32x32xf32>
    %50 = tpu.matmul %3, %49, %cst_27 {dimension_numbers = #tpu.dot_dimension_numbers<[1], [0], [0], [1], [0, 0, 1, 1], [], []>} : vector<32x32xf32>, vector<32x32xf32>, vector<32x32xf32> -> vector<32x32xf32>
    %51 = vector.broadcast %11 : vector<1x32xf32> to vector<32x32xf32>
    %52 = arith.addf %50, %51 : vector<32x32xf32>
    %cst_28 = arith.constant 0.000000e+00 : f32
    %53 = vector.broadcast %cst_28 : f32 to vector<32x32xf32>
    %54 = arith.maximumf %52, %53 : vector<32x32xf32>
    %55 = tpu.iota {dimensions = array<i32: 0>} : vector<4x32xi32>
    %56 = tpu.iota {dimensions = array<i32: 1>} : vector<4x32xi32>
    %c8_i32 = arith.constant 8 : i32
    %57 = vector.broadcast %c8_i32 : i32 to vector<4x32xi32>
    %58 = arith.muli %55, %57 : vector<4x32xi32>
    %59 = arith.cmpi sge, %56, %58 : vector<4x32xi32>
    %c8_i32_29 = arith.constant 8 : i32
    %60 = vector.broadcast %c8_i32_29 : i32 to vector<4x32xi32>
    %61 = arith.addi %58, %60 : vector<4x32xi32>
    %62 = arith.cmpi slt, %56, %61 : vector<4x32xi32>
    %63 = arith.andi %59, %62 : vector<4x32xi1>
    %cst_30 = arith.constant 1.000000e+00 : f32
    %cst_31 = arith.constant 0.000000e+00 : f32
    %64 = vector.broadcast %cst_30 : f32 to vector<4x32xf32>
    %65 = vector.broadcast %cst_31 : f32 to vector<4x32xf32>
    %66 = arith.select %63, %64, %65 : vector<4x32xi1>, vector<4x32xf32>
    %cst_32 = arith.constant dense<0.000000e+00> : vector<4x32xf32>
    %67 = tpu.matmul %66, %54, %cst_32 {dimension_numbers = #tpu.dot_dimension_numbers<[1], [0], [0], [1], [0, 0, 1, 1], [], []>} : vector<4x32xf32>, vector<32x32xf32>, vector<4x32xf32> -> vector<4x32xf32>
    %cst_33 = arith.constant 1.250000e-01 : f32
    %68 = vector.broadcast %cst_33 : f32 to vector<4x32xf32>
    %69 = arith.mulf %67, %68 : vector<4x32xf32>
    %70 = vector.broadcast %12 : vector<1x32xf32> to vector<4x32xf32>
    %71 = arith.mulf %69, %70 : vector<4x32xf32>
    %cst_34 = arith.constant 3.125000e-02 : f32
    %72 = vector.broadcast %cst_34 : f32 to vector<1x32xf32>
    %73 = arith.mulf %13, %72 : vector<1x32xf32>
    %74 = vector.broadcast %73 : vector<1x32xf32> to vector<4x32xf32>
    %75 = arith.addf %71, %74 : vector<4x32xf32>
    %cst_35 = arith.constant dense<0.000000e+00> : vector<4xf32>
    %76 = vector.multi_reduction <add>, %75, %cst_35 [1] : vector<4x32xf32> to vector<4xf32>
    %77 = vector.shape_cast %76 : vector<4xf32> to vector<4x1xf32>
    %78 = vector.shape_cast %77 : vector<4x1xf32> to vector<4x1xf32>
    %79 = vector.broadcast %78 : vector<4x1xf32> to vector<4x128xf32>
    %c0_36 = arith.constant 0 : index
    %c0_37 = arith.constant 0 : index
    %c0_38 = arith.constant 0 : index
    %80 = vector.load %arg5[%c0_36, %c0_37, %c0_38] : memref<1x4x128xf32, #tpu.memory_space<vmem>>, vector<1x4x128xf32>
    %81 = vector.shape_cast %80 : vector<1x4x128xf32> to vector<4x128xf32>
    %82 = vector.shape_cast %79 : vector<4x128xf32> to vector<1x4x128xf32>
    tpu.vector_store %arg5[%c0_36, %c0_37, %c0_38], %82 {strides = array<i32>} : memref<1x4x128xf32, #tpu.memory_space<vmem>>, vector<1x4x128xf32>,
    return
  }
  func.func @transform_0(%arg0: i32) -> (i32, i32, i32) {
    %c0_i32 = arith.constant 0 : i32
    %c0_i32_0 = arith.constant 0 : i32
    %c0_i32_1 = arith.constant 0 : i32
    return %arg0, %c0_i32, %c0_i32_0 : i32, i32, i32
  }
  func.func @transform_1(%arg0: i32) -> (i32, i32, i32) {
    %c0_i32 = arith.constant 0 : i32
    %c0_i32_0 = arith.constant 0 : i32
    %c0_i32_1 = arith.constant 0 : i32
    return %arg0, %c0_i32, %c0_i32_0 : i32, i32, i32
  }
  func.func @transform_2(%arg0: i32) -> (i32, i32) {
    %c0_i32 = arith.constant 0 : i32
    %c0_i32_0 = arith.constant 0 : i32
    %c0_i32_1 = arith.constant 0 : i32
    return %c0_i32, %c0_i32_0 : i32, i32
  }
  func.func @transform_3(%arg0: i32) -> (i32, i32) {
    %c0_i32 = arith.constant 0 : i32
    %c0_i32_0 = arith.constant 0 : i32
    %c0_i32_1 = arith.constant 0 : i32
    return %c0_i32, %c0_i32_0 : i32, i32
  }
  func.func @transform_4(%arg0: i32) -> (i32, i32, i32) {
    %c0_i32 = arith.constant 0 : i32
    %c0_i32_0 = arith.constant 0 : i32
    %c0_i32_1 = arith.constant 0 : i32
    return %arg0, %c0_i32, %c0_i32_0 : i32, i32, i32
  }
}

</mosaic_0001>

<llo_original>
// kernel: tpu_custom_call.1
$region0: #{tpu_custom_call.1}
  #allocation0 [shape = 'u32[]', space=smem, size = 0x4, offset = 0x4, fixed_abs, tag = 'smem constant byte address 0x4 - core index']
  #allocation1 [shape = 'u32[144,128]{1,0:T(1,128)}', space=vmem, size = 0x12000, scoped, tag = 'internal scratch']
  %s0 = inlined_call_operand.vmem [shape: f32[2,32,16], index: 0, kind: input, shape index: {}]
  %s1 = inlined_call_operand.vmem [shape: f32[2,32,32], index: 1, kind: input, shape index: {}]
  %s2 = inlined_call_operand.vmem [shape: f32[80,32], index: 2, kind: input, shape index: {}]
  %s3 = inlined_call_operand.vmem [shape: f32[8,32], index: 3, kind: input, shape index: {}]
  %s4 = inlined_call_operand.hbm [shape: f32[2,4,128], index: 4, kind: output, shape index: {}]
  %s5 = sld [smem:[#allocation0]]
  $region49: #{tpu_custom_call.1} parent=0
    _
  %s7 = ssub.s32 1, %s5
  %s8 = scalar_select 0, %s7, %s5
  $region1: #{tpu_custom_call.1} parent=0
    #allocation2 [shape = 'u8[4096]{0}', space=vmem, size = 0x1000, scoped, tag = 'output window, operand 0']
    #allocation3 [shape = 's32[2]{0}', space=sflag, size = 0x8, scoped, tag = 'scoped memory for tpu_custom_call.1']
    %9 = vsyncpa [#allocation3], 0
    %s10 = scalar_lea.sflag [#allocation3], 1
    %11 = vsyncpa %s10, 0
    loop: start=0, step=1, limit=4
    $region2: #{tpu_custom_call.1} parent=1 // loop_pre_header
      _
    $region3: #{tpu_custom_call.1} parent=1 // loop_header
      %s13 = sphi 0, %s17
      %p14 = scmp.ge.s32.totalorder %s13, 4
      %s23 = sphi 0, %s25
      %s26 = sphi 0, %s23
      %s27 = sphi 0, %s26
      %s43 = sphi 0, %s27
      %s49 = sphi 0, %s51
      %s52 = sphi 0, %s49
      %s53 = sphi 0, %s52
      %s69 = sphi 0, %s53
      %s73 = sphi 0, %s73
      %s75 = sphi 0, %s73
      %s76 = sphi 0, %s75
      %s90 = sphi 0, %s76
      %s94 = sphi 0, %s94
      %s96 = sphi 0, %s94
      %s97 = sphi 0, %s96
      %s111 = sphi 0, %s97
      %s117 = sphi 0, %s119
      %s120 = sphi 0, %s117
      %s121 = sphi 0, %s120
      %s137 = sphi 0, %s121
    $region4: #{tpu_custom_call.1} parent=1 // loop_header_branch
      %16 = sbr.rel (%p14) target = $region8
    $region5: #{tpu_custom_call.1} parent=1 // loop_body
      %s18 = ssub.s32 %s13, 1
      %s19 = ssub.s32 %s13, 2
      %s20 = sadd.s32 %s13, 1
      %s21 = ssub.s32 %s13, %s20
      %p22 = scmp.eq.s32.totalorder %s21, 0
      %s24 = sadd.s32 %s23, 1
      %s25 = scalar_select %p22, %s23, %s24
      %p28 = pneg %p22
      %p29 = scmp.eq.s32.totalorder %s13, 1
      %p30 = por %p28, %p29
      %p31 = scmp.ne.s32.totalorder %s23, %s26
      %p32 = scmp.eq.s32.totalorder %s13, 0
      %p33 = por %p31, %p32
      %p34 = scmp.ne.s32.totalorder %s23, %s26
      %p35 = scmp.eq.s32.totalorder %s18, 1
      %p36 = por %p34, %p35
      %p37 = scmp.ne.s32.totalorder %s26, %s27
      %p38 = scmp.eq.s32.totalorder %s18, 0
      %p39 = por %p37, %p38
      %p40 = scmp.ne.s32.totalorder %s26, %s27
      %p41 = scmp.eq.s32.totalorder %s19, 1
      %p42 = por %p40, %p41
      %p44 = scmp.ne.s32.totalorder %s27, %s43
      %p45 = scmp.eq.s32.totalorder %s19, 0
      %p46 = por %p44, %p45
      %s47 = ssub.s32 %s13, %s20
      %p48 = scmp.eq.s32.totalorder %s47, 0
      %s50 = sadd.s32 %s49, 1
      %s51 = scalar_select %p48, %s49, %s50
      %p54 = pneg %p48
      %p55 = scmp.eq.s32.totalorder %s13, 1
      %p56 = por %p54, %p55
      %p57 = scmp.ne.s32.totalorder %s49, %s52
      %p58 = scmp.eq.s32.totalorder %s13, 0
      %p59 = por %p57, %p58
      %p60 = scmp.ne.s32.totalorder %s49, %s52
      %p61 = scmp.eq.s32.totalorder %s18, 1
      %p62 = por %p60, %p61
      %p63 = scmp.ne.s32.totalorder %s52, %s53
      %p64 = scmp.eq.s32.totalorder %s18, 0
      %p65 = por %p63, %p64
      %p66 = scmp.ne.s32.totalorder %s52, %s53
      %p67 = scmp.eq.s32.totalorder %s19, 1
      %p68 = por %p66, %p67
      %p70 = scmp.ne.s32.totalorder %s53, %s69
      %p71 = scmp.eq.s32.totalorder %s19, 0
      %p72 = por %p70, %p71
      %s74 = sadd.s32 %s73, 1
      %p77 = scmp.eq.s32.totalorder %s13, 1
      %p78 = scmp.ne.s32.totalorder %s73, %s75
      %p79 = scmp.eq.s32.totalorder %s13, 0
      %p80 = por %p78, %p79
      %p81 = scmp.ne.s32.totalorder %s73, %s75
      %p82 = scmp.eq.s32.totalorder %s18, 1
      %p83 = por %p81, %p82
      %p84 = scmp.ne.s32.totalorder %s75, %s76
      %p85 = scmp.eq.s32.totalorder %s18, 0
      %p86 = por %p84, %p85
      %p87 = scmp.ne.s32.totalorder %s75, %s76
      %p88 = scmp.eq.s32.totalorder %s19, 1
      %p89 = por %p87, %p88
      %p91 = scmp.ne.s32.totalorder %s76, %s90
      %p92 = scmp.eq.s32.totalorder %s19, 0
      %p93 = por %p91, %p92
      %s95 = sadd.s32 %s94, 1
      %p98 = scmp.eq.s32.totalorder %s13, 1
      %p99 = scmp.ne.s32.totalorder %s94, %s96
      %p100 = scmp.eq.s32.totalorder %s13, 0
      %p101 = por %p99, %p100
      %p102 = scmp.ne.s32.totalorder %s94, %s96
      %p103 = scmp.eq.s32.totalorder %s18, 1
      %p104 = por %p102, %p103
      %p105 = scmp.ne.s32.totalorder %s96, %s97
      %p106 = scmp.eq.s32.totalorder %s18, 0
      %p107 = por %p105, %p106
      %p108 = scmp.ne.s32.totalorder %s96, %s97
      %p109 = scmp.eq.s32.totalorder %s19, 1
      %p110 = por %p108, %p109
      %p112 = scmp.ne.s32.totalorder %s97, %s111
      %p113 = scmp.eq.s32.totalorder %s19, 0
      %p114 = por %p112, %p113
      %s115 = ssub.s32 %s13, %s20
      %p116 = scmp.eq.s32.totalorder %s115, 0
      %s118 = sadd.s32 %s117, 1
      %s119 = scalar_select %p116, %s117, %s118
      %p122 = pneg %p116
      %p123 = scmp.eq.s32.totalorder %s13, 1
      %p124 = por %p122, %p123
      %p125 = scmp.ne.s32.totalorder %s117, %s120
      %p126 = scmp.eq.s32.totalorder %s13, 0
      %p127 = por %p125, %p126
      %p128 = scmp.ne.s32.totalorder %s117, %s120
      %p129 = scmp.eq.s32.totalorder %s18, 1
      %p130 = por %p128, %p129
      %p131 = scmp.ne.s32.totalorder %s120, %s121
      %p132 = scmp.eq.s32.totalorder %s18, 0
      %p133 = por %p131, %p132
      %p134 = scmp.ne.s32.totalorder %s120, %s121
      %p135 = scmp.eq.s32.totalorder %s19, 1
      %p136 = por %p134, %p135
      %p138 = scmp.ne.s32.totalorder %s121, %s137
      %p139 = scmp.eq.s32.totalorder %s19, 0
      %p140 = por %p138, %p139
      %p141 = scmp.le.s32.totalorder 1, %s13
      %p142 = scmp.lt.s32.totalorder %s13, 3
      %p143 = pnand %p141, %p142
      %p144 = pneg %p143
      // Predicated region
      $region9: #{tpu_custom_call.1} parent=5 // pred_check
        _
      $region10: #{tpu_custom_call.1} parent=5 // pred_check_branch
        %146 = sbr.rel (%p143) target = $region12
      $region11: #{tpu_custom_call.1} parent=5 // pred_region
        %s147 = ssub.s32 %s13, 1
        // Predicated region
        $region13: #{tpu_custom_call.1} parent=11 // pred_check
          %p148 = pneg %p86
        $region14: #{tpu_custom_call.1} parent=11 // pred_check_branch
          %150 = sbr.rel (%p148) target = $region16
        $region15: #{tpu_custom_call.1} parent=11 // pred_region
          _
        $region16: #{tpu_custom_call.1} parent=11 // pred_fallthru
          _
        // Predicated region
        $region17: #{tpu_custom_call.1} parent=11 // pred_check
          %p151 = pneg %p107
        $region18: #{tpu_custom_call.1} parent=11 // pred_check_branch
          %153 = sbr.rel (%p151) target = $region20
        $region19: #{tpu_custom_call.1} parent=11 // pred_region
          _
        $region20: #{tpu_custom_call.1} parent=11 // pred_fallthru
          _
      $region12: #{tpu_custom_call.1} parent=5 // pred_fallthru
        _
      %p154 = scmp.lt.s32.totalorder %s13, 2
      // Predicated region
      $region21: #{tpu_custom_call.1} parent=5 // pred_check
        %p155 = pneg %p154
      $region22: #{tpu_custom_call.1} parent=5 // pred_check_branch
        %157 = sbr.rel (%p155) target = $region24
      $region23: #{tpu_custom_call.1} parent=5 // pred_region
        // Predicated region
        $region25: #{tpu_custom_call.1} parent=23 // pred_check
          %p158 = pneg %p33
        $region26: #{tpu_custom_call.1} parent=23 // pred_check_branch
          %160 = sbr.rel (%p158) target = $region28
        $region27: #{tpu_custom_call.1} parent=23 // pred_region
          %p161 = scmp.lt.s32.totalorder %s13, 1
          %s162 = scalar_select %p161, %s13, 1
          %s163 = smul.addr %s162, 4
          %s164 = smul.addr %s163, 8
          %s165 = scalar_lea.vmem %s0, %s164
        $region28: #{tpu_custom_call.1} parent=23 // pred_fallthru
          _
        // Predicated region
        $region29: #{tpu_custom_call.1} parent=23 // pred_check
          %p166 = pneg %p59
        $region30: #{tpu_custom_call.1} parent=23 // pred_check_branch
          %168 = sbr.rel (%p166) target = $region32
        $region31: #{tpu_custom_call.1} parent=23 // pred_region
          %p169 = scmp.lt.s32.totalorder %s13, 1
          %s170 = scalar_select %p169, %s13, 1
          %s171 = smul.addr %s170, 4
          %s172 = smul.addr %s171, 8
          %s173 = scalar_lea.vmem %s1, %s172
        $region32: #{tpu_custom_call.1} parent=23 // pred_fallthru
          _
      $region24: #{tpu_custom_call.1} parent=5 // pred_fallthru
        _
      %p174 = scmp.le.s32.totalorder 1, %s13
      %p175 = scmp.lt.s32.totalorder %s13, 3
      %p176 = pnand %p174, %p175
      %p177 = pneg %p176
      // Predicated region
      $region33: #{tpu_custom_call.1} parent=5 // pred_check
        _
      $region34: #{tpu_custom_call.1} parent=5 // pred_check_branch
        %179 = sbr.rel (%p176) target = $region36
      $region35: #{tpu_custom_call.1} parent=5 // pred_region
        %s180 = ssub.s32 %s13, 1
        %p181 = scmp.lt.s32.totalorder %s18, 1
        %s182 = scalar_select %p181, %s18, 1
        %s183 = smul.addr %s182, 4
        %s184 = smul.addr %s183, 8
        %s185 = scalar_lea.vmem %s0, %s184
        %p186 = pneg %p39
        %p187 = pneg %p36
        %p188 = scmp.lt.s32.totalorder %s18, 1
        %s189 = scalar_select %p188, %s18, 1
        %s190 = smul.addr %s189, 4
        %s191 = smul.addr %s190, 8
        %s192 = scalar_lea.vmem %s1, %s191
        %p193 = pneg %p65
        %p194 = pneg %p62
        %p195 = pneg %p86
        %p196 = pneg %p83
        %p197 = pneg %p107
        %p198 = pneg %p104
        %p199 = pneg %p133
        %p200 = pneg %p130
        %s201 = sand.u32 %s120, 1
        %s202 = scalar_lea.sflag [#allocation3], %s201
        %s203 = sand.u32 %s120, 1
        %s204 = smul.addr %s203, 4
        %s205 = scalar_lea.vmem [#allocation2], %s204
        %p206 = scmp.lt.s32.totalorder %s18, 1
        %s207 = scalar_select %p206, %s18, 1
        %s208 = smul.addr %s207, 4
        %s209 = smul.addr %s208, 8
        %s210 = scalar_lea.vmem %s0, %s209
        %p211 = scmp.lt.s32.totalorder %s18, 1
        %s212 = scalar_select %p211, %s18, 1
        %s213 = smul.addr %s212, 4
        %s214 = smul.addr %s213, 8
        %s215 = scalar_lea.vmem %s1, %s214
        %v216 = vld [vmem:[%s210] sm:$0xff]
        %v217 = vld [vmem:[%s210 + $0x8] sm:$0xff]
        %v218 = vld [vmem:[%s210 + $0x10] sm:$0xff]
        %v219 = vld [vmem:[%s210 + $0x18] sm:$0xff]
        %v220 = vld [vmem:[%s215] sm:$0xff]
        %v221 = vld [vmem:[%s215 + $0x8] sm:$0xff]
        %v222 = vld [vmem:[%s215 + $0x10] sm:$0xff]
        %v223 = vld [vmem:[%s215 + $0x18] sm:$0xff]
        %v224 = vld [vmem:[%s2] sm:$0xff]
        %v225 = vld [vmem:[%s2 + $0x8] sm:$0xff]
        %v226 = vld [vmem:[%s2 + $0x10] sm:$0xff]
        %v227 = vld [vmem:[%s2 + $0x18] sm:$0xff]
        %v228 = vld [vmem:[%s2 + $0x20] sm:$0xff]
        %v229 = vld [vmem:[%s2 + $0x28] sm:$0xff]
        %v230 = vld [vmem:[%s2 + $0x30] sm:$0xff]
        %v231 = vld [vmem:[%s2 + $0x38] sm:$0xff]
        %v232 = vld [vmem:[%s2 + $0x40] sm:$0xff]
        %v233 = vld [vmem:[%s2 + $0x48] sm:$0xff]
        %v234 = vld [vmem:[%s3] sm:$0x1]
        %v235 = vld [vmem:[%s3 + $0x1] sm:$0x1]
        %v236 = vld [vmem:[%s3 + $0x2] sm:$0x1]
        %v237 = vld [vmem:[%s3 + $0x3] sm:$0x1]
        %v238 = vld [vmem:[%s3 + $0x4] sm:$0x1]
        %v239 = vld [vmem:[%s3 + $0x5] sm:$0x1]
        %v240 = vld [vmem:[%s3 + $0x6] sm:$0x1]
        %vm241 = vcmask 130048
        %v243 = vsel %vm241, %v216, 0
        %v246 = vsel %vm241, %v217, 0
        %v249 = vsel %vm241, %v218, 0
        %v252 = vsel %vm241, %v219, 0
        %254 = vmatprep.subr.mxu0 0.0
        %255 = vmatpush1.msra.mxu0 0.0
        %256 = vmatprep.subr.mxu0 0.0
        %257 = vmatpush1.msra.mxu0 0.0
        %258 = vmatprep.subr.mxu0 0.0
        %259 = vmatpush1.msra.mxu0 0.0
        %260 = vmatprep.subr.mxu0 0.0
        %261 = vmatpush1.msra.mxu0 0.0
        %262 = vmatprep.subr.mxu0 0.0
        %263 = vmatpush1.msra.mxu0 0.0
        %264 = vmatprep.subr.mxu0 0.0
        %265 = vmatpush1.msra.mxu0 0.0
        %266 = vmatprep.subr.mxu0 0.0
        %267 = vmatpush1.msra.mxu0 0.0
        %268 = vmatprep.subr.mxu0 0.0
        %269 = vmatpush1.msra.mxu0 0.0
        %270 = vmatprep.subr.mxu0 0.0
        %271 = vmatpush1.msra.mxu0 0.0
        %272 = vmatprep.subr.mxu0 0.0
        %273 = vmatpush1.msra.mxu0 0.0
        %274 = vmatprep.subr.mxu0 0.0
        %275 = vmatpush1.msra.mxu0 0.0
        %276 = vmatprep.subr.mxu0 0.0
        %277 = vmatpush1.msra.mxu0 0.0
        %278 = vmatprep.subr.mxu0 0.0
        %279 = vmatpush1.msra.mxu0 0.0
        %280 = vmatprep.subr.mxu0 0.0
        %281 = vmatpush1.msra.mxu0 0.0
        %282 = vmatprep.subr.mxu0 0.0
        %283 = vmatpush1.msra.mxu0 %v225
        %284 = vmatprep.subr.mxu0 0.0
        %285 = vmatpush1.msra.mxu0 %v224
        %286 = vmatprep.subr.mxu0 0.0
        %287 = vmatpush2.msra.mxu0 0.0
        %288 = vmatprep.subr.mxu0 0.0
        %289 = vmatpush2.msra.mxu0 0.0
        %290 = vmatprep.subr.mxu0 0.0
        %291 = vmatpush2.msra.mxu0 0.0
        %292 = vmatprep.subr.mxu0 0.0
        %293 = vmatpush2.msra.mxu0 0.0
        %294 = vmatprep.subr.mxu0 0.0
        %295 = vmatpush2.msra.mxu0 0.0
        %296 = vmatprep.subr.mxu0 0.0
        %297 = vmatpush2.msra.mxu0 0.0
        %298 = vmatprep.subr.mxu0 0.0
        %299 = vmatpush2.msra.mxu0 0.0
        %300 = vmatprep.subr.mxu0 0.0
        %301 = vmatpush2.msra.mxu0 0.0
        %302 = vmatprep.subr.mxu0 0.0
        %303 = vmatpush2.msra.mxu0 0.0
        %304 = vmatprep.subr.mxu0 0.0
        %305 = vmatpush2.msra.mxu0 0.0
        %306 = vmatprep.subr.mxu0 0.0
        %307 = vmatpush2.msra.mxu0 0.0
        %308 = vmatprep.subr.mxu0 0.0
        %309 = vmatpush2.msra.mxu0 0.0
        %310 = vmatprep.subr.mxu0 0.0
        %311 = vmatpush2.msra.mxu0 0.0
        %312 = vmatprep.subr.mxu0 0.0
        %313 = vmatpush2.msra.mxu0 0.0
        %314 = vmatprep.subr.mxu0 0.0
        %315 = vmatpush2.msra.mxu0 0.0
        %316 = vmatprep.subr.mxu0 0.0
        %317 = vmatpush2.msra.mxu0 0.0
        %318 = vmatprep.mubr.f32.mxu0 0.0
        %319 = vmatmul.mubr.f32.gmra.mxu0 %v243
        %v320 = vpop.f32.mrf.mxu0
        %v321 = vadd.f32 0.0, %v320
        %v322 = vpop.f32.mrf.mxu0
        %323 = vmatprep.mubr.f32.mxu0 0.0
        %324 = vmatmul.mubr.f32.gmra.mxu0 %v246
        %v325 = vpop.f32.mrf.mxu0
        %v326 = vadd.f32 0.0, %v325
        %v327 = vpop.f32.mrf.mxu0
        %328 = vmatprep.mubr.f32.mxu0 0.0
        %329 = vmatmul.mubr.f32.gmra.mxu0 %v249
        %v330 = vpop.f32.mrf.mxu0
        %v331 = vadd.f32 0.0, %v330
        %v332 = vpop.f32.mrf.mxu0
        %333 = vmatprep.mubr.f32.mxu0 0.0
        %334 = vmatmul.mubr.f32.gmra.mxu0 %v252
        %v335 = vpop.f32.mrf.mxu0
        %v336 = vadd.f32 0.0, %v335
        %v337 = vpop.f32.mrf.mxu0
        %338 = vdwg.mxu0
        %v339 = vlaneseq
        %v340 = vshrl.u32 %v339, 7
        %v341 = vsub.s32 0, %v340
        %v342 = vrot.slane %v234, %v341
        %vm343 = vcmask 261120
        %v345 = vsel %vm343, %v220, 0
        %v348 = vsel %vm343, %v221, 0
        %v351 = vsel %vm343, %v222, 0
        %v354 = vsel %vm343, %v223, 0
        %356 = vmatprep.subr.mxu0 0.0
        %357 = vmatpush1.msra.mxu0 0.0
        %358 = vmatprep.subr.mxu0 0.0
        %359 = vmatpush1.msra.mxu0 0.0
        %360 = vmatprep.subr.mxu0 0.0
        %361 = vmatpush1.msra.mxu0 0.0
        %362 = vmatprep.subr.mxu0 0.0
        %363 = vmatpush1.msra.mxu0 0.0
        %364 = vmatprep.subr.mxu0 0.0
        %365 = vmatpush1.msra.mxu0 0.0
        %366 = vmatprep.subr.mxu0 0.0
        %367 = vmatpush1.msra.mxu0 0.0
        %368 = vmatprep.subr.mxu0 0.0
        %369 = vmatpush1.msra.mxu0 0.0
        %370 = vmatprep.subr.mxu0 0.0
        %371 = vmatpush1.msra.mxu0 0.0
        %372 = vmatprep.subr.mxu0 0.0
        %373 = vmatpush1.msra.mxu0 0.0
        %374 = vmatprep.subr.mxu0 0.0
        %375 = vmatpush1.msra.mxu0 0.0
        %376 = vmatprep.subr.mxu0 0.0
        %377 = vmatpush1.msra.mxu0 0.0
        %378 = vmatprep.subr.mxu0 0.0
        %379 = vmatpush1.msra.mxu0 0.0
        %380 = vmatprep.subr.mxu0 0.0
        %381 = vmatpush1.msra.mxu0 %v336
        %382 = vmatprep.subr.mxu0 0.0
        %383 = vmatpush1.msra.mxu0 %v331
        %384 = vmatprep.subr.mxu0 0.0
        %385 = vmatpush1.msra.mxu0 %v326
        %386 = vmatprep.subr.mxu0 0.0
        %387 = vmatpush1.msra.mxu0 %v321
        %388 = vmatprep.subr.mxu0 0.0
        %389 = vmatpush2.msra.mxu0 0.0
        %390 = vmatprep.subr.mxu0 0.0
        %391 = vmatpush2.msra.mxu0 0.0
        %392 = vmatprep.subr.mxu0 0.0
        %393 = vmatpush2.msra.mxu0 0.0
        %394 = vmatprep.subr.mxu0 0.0
        %395 = vmatpush2.msra.mxu0 0.0
        %396 = vmatprep.subr.mxu0 0.0
        %397 = vmatpush2.msra.mxu0 0.0
        %398 = vmatprep.subr.mxu0 0.0
        %399 = vmatpush2.msra.mxu0 0.0
        %400 = vmatprep.subr.mxu0 0.0
        %401 = vmatpush2.msra.mxu0 0.0
        %402 = vmatprep.subr.mxu0 0.0
        %403 = vmatpush2.msra.mxu0 0.0
        %404 = vmatprep.subr.mxu0 0.0
        %405 = vmatpush2.msra.mxu0 0.0
        %406 = vmatprep.subr.mxu0 0.0
        %407 = vmatpush2.msra.mxu0 0.0
        %408 = vmatprep.subr.mxu0 0.0
        %409 = vmatpush2.msra.mxu0 0.0
        %410 = vmatprep.subr.mxu0 0.0
        %411 = vmatpush2.msra.mxu0 0.0
        %412 = vmatprep.subr.mxu0 0.0
        %413 = vmatpush2.msra.mxu0 0.0
        %414 = vmatprep.subr.mxu0 0.0
        %415 = vmatpush2.msra.mxu0 0.0
        %416 = vmatprep.subr.mxu0 0.0
        %417 = vmatpush2.msra.mxu0 0.0
        %418 = vmatprep.subr.mxu0 0.0
        %419 = vmatpush2.msra.mxu0 0.0
        %420 = vmatprep.mubr.f32.mxu0 0.0
        %421 = vmatmul.mubr.f32.gmra.mxu0 %v345
        %v422 = vpop.f32.mrf.mxu0
        %v423 = vadd.f32 %v342, %v422
        %v424 = vpop.f32.mrf.mxu0
        %425 = vmatprep.mubr.f32.mxu0 0.0
        %426 = vmatmul.mubr.f32.gmra.mxu0 %v348
        %v427 = vpop.f32.mrf.mxu0
        %v428 = vadd.f32 %v342, %v427
        %v429 = vpop.f32.mrf.mxu0
        %430 = vmatprep.mubr.f32.mxu0 0.0
        %431 = vmatmul.mubr.f32.gmra.mxu0 %v351
        %v432 = vpop.f32.mrf.mxu0
        %v433 = vadd.f32 %v342, %v432
        %v434 = vpop.f32.mrf.mxu0
        %435 = vmatprep.mubr.f32.mxu0 0.0
        %436 = vmatmul.mubr.f32.gmra.mxu0 %v354
        %v437 = vpop.f32.mrf.mxu0
        %v438 = vadd.f32 %v342, %v437
        %v439 = vpop.f32.mrf.mxu0
        %440 = vdwg.mxu0
        %v441 = vmax.f32 %v423, 0.0
        %v442 = vmax.f32 %v428, 0.0
        %v443 = vmax.f32 %v433, 0.0
        %v444 = vmax.f32 %v438, 0.0
        %v445 = vlaneseq
        %v446 = vshrl.u32 %v445, 7
        %v447 = vsub.s32 0, %v446
        %v448 = vrot.slane %v235, %v447
        %v450 = vsel %vm343, %v441, 0
        %v453 = vsel %vm343, %v442, 0
        %v456 = vsel %vm343, %v443, 0
        %v459 = vsel %vm343, %v444, 0
        %461 = vmatprep.subr.mxu0 0.0
        %462 = vmatpush1.msra.mxu0 0.0
        %463 = vmatprep.subr.mxu0 0.0
        %464 = vmatpush1.msra.mxu0 0.0
        %465 = vmatprep.subr.mxu0 0.0
        %466 = vmatpush1.msra.mxu0 0.0
        %467 = vmatprep.subr.mxu0 0.0
        %468 = vmatpush1.msra.mxu0 0.0
        %469 = vmatprep.subr.mxu0 0.0
        %470 = vmatpush1.msra.mxu0 0.0
        %471 = vmatprep.subr.mxu0 0.0
        %472 = vmatpush1.msra.mxu0 0.0
        %473 = vmatprep.subr.mxu0 0.0
        %474 = vmatpush1.msra.mxu0 0.0
        %475 = vmatprep.subr.mxu0 0.0
        %476 = vmatpush1.msra.mxu0 0.0
        %477 = vmatprep.subr.mxu0 0.0
        %478 = vmatpush1.msra.mxu0 0.0
        %479 = vmatprep.subr.mxu0 0.0
        %480 = vmatpush1.msra.mxu0 0.0
        %481 = vmatprep.subr.mxu0 0.0
        %482 = vmatpush1.msra.mxu0 0.0
        %483 = vmatprep.subr.mxu0 0.0
        %484 = vmatpush1.msra.mxu0 0.0
        %485 = vmatprep.subr.mxu0 0.0
        %486 = vmatpush1.msra.mxu0 %v229
        %487 = vmatprep.subr.mxu0 0.0
        %488 = vmatpush1.msra.mxu0 %v228
        %489 = vmatprep.subr.mxu0 0.0
        %490 = vmatpush1.msra.mxu0 %v227
        %491 = vmatprep.subr.mxu0 0.0
        %492 = vmatpush1.msra.mxu0 %v226
        %493 = vmatprep.subr.mxu0 0.0
        %494 = vmatpush2.msra.mxu0 0.0
        %495 = vmatprep.subr.mxu0 0.0
        %496 = vmatpush2.msra.mxu0 0.0
        %497 = vmatprep.subr.mxu0 0.0
        %498 = vmatpush2.msra.mxu0 0.0
        %499 = vmatprep.subr.mxu0 0.0
        %500 = vmatpush2.msra.mxu0 0.0
        %501 = vmatprep.subr.mxu0 0.0
        %502 = vmatpush2.msra.mxu0 0.0
        %503 = vmatprep.subr.mxu0 0.0
        %504 = vmatpush2.msra.mxu0 0.0
        %505 = vmatprep.subr.mxu0 0.0
        %506 = vmatpush2.msra.mxu0 0.0
        %507 = vmatprep.subr.mxu0 0.0
        %508 = vmatpush2.msra.mxu0 0.0
        %509 = vmatprep.subr.mxu0 0.0
        %510 = vmatpush2.msra.mxu0 0.0
        %511 = vmatprep.subr.mxu0 0.0
        %512 = vmatpush2.msra.mxu0 0.0
        %513 = vmatprep.subr.mxu0 0.0
        %514 = vmatpush2.msra.mxu0 0.0
        %515 = vmatprep.subr.mxu0 0.0
        %516 = vmatpush2.msra.mxu0 0.0
        %517 = vmatprep.subr.mxu0 0.0
        %518 = vmatpush2.msra.mxu0 0.0
        %519 = vmatprep.subr.mxu0 0.0
        %520 = vmatpush2.msra.mxu0 0.0
        %521 = vmatprep.subr.mxu0 0.0
        %522 = vmatpush2.msra.mxu0 0.0
        %523 = vmatprep.subr.mxu0 0.0
        %524 = vmatpush2.msra.mxu0 0.0
        %525 = vmatprep.mubr.f32.mxu0 0.0
        %526 = vmatmul.mubr.f32.gmra.mxu0 %v450
        %v527 = vpop.f32.mrf.mxu0
        %v528 = vadd.f32 %v448, %v527
        %v529 = vpop.f32.mrf.mxu0
        %530 = vmatprep.mubr.f32.mxu0 0.0
        %531 = vmatmul.mubr.f32.gmra.mxu0 %v453
        %v532 = vpop.f32.mrf.mxu0
        %v533 = vadd.f32 %v448, %v532
        %v534 = vpop.f32.mrf.mxu0
        %535 = vmatprep.mubr.f32.mxu0 0.0
        %536 = vmatmul.mubr.f32.gmra.mxu0 %v456
        %v537 = vpop.f32.mrf.mxu0
        %v538 = vadd.f32 %v448, %v537
        %v539 = vpop.f32.mrf.mxu0
        %540 = vmatprep.mubr.f32.mxu0 0.0
        %541 = vmatmul.mubr.f32.gmra.mxu0 %v459
        %v542 = vpop.f32.mrf.mxu0
        %v543 = vadd.f32 %v448, %v542
        %v544 = vpop.f32.mrf.mxu0
        %545 = vdwg.mxu0
        %v546 = vsel %vm343, %v528, 0.0
        %547 = vadd.xlane.f32.xlu0 %v546
        %v548 = vpop.xlane.xlu0 %547
        %v549 = vsel %vm343, %v533, 0.0
        %550 = vadd.xlane.f32.xlu0 %v549
        %v551 = vpop.xlane.xlu0 %550
        %v552 = vsel %vm343, %v538, 0.0
        %553 = vadd.xlane.f32.xlu0 %v552
        %v554 = vpop.xlane.xlu0 %553
        %v555 = vsel %vm343, %v543, 0.0
        %556 = vadd.xlane.f32.xlu0 %v555
        %v557 = vpop.xlane.xlu0 %556
        %v558 = vrcp.pop 32.0
        %v559 = vmul.f32 %v548, %v558
        %v560 = vmul.f32 %v551, %v558
        %v561 = vmul.f32 %v554, %v558
        %v562 = vmul.f32 %v557, %v558
        %v563 = vsub.f32 %v528, %v559
        %v564 = vsub.f32 %v533, %v560
        %v565 = vsub.f32 %v538, %v561
        %v566 = vsub.f32 %v543, %v562
        %v567 = vmul.f32 %v563, %v563
        %v568 = vmul.f32 %v564, %v564
        %v569 = vmul.f32 %v565, %v565
        %v570 = vmul.f32 %v566, %v566
        %v571 = vsel %vm343, %v567, 0.0
        %572 = vadd.xlane.f32.xlu0 %v571
        %v573 = vpop.xlane.xlu0 %572
        %v574 = vsel %vm343, %v568, 0.0
        %575 = vadd.xlane.f32.xlu0 %v574
        %v576 = vpop.xlane.xlu0 %575
        %v577 = vsel %vm343, %v569, 0.0
        %578 = vadd.xlane.f32.xlu0 %v577
        %v579 = vpop.xlane.xlu0 %578
        %v580 = vsel %vm343, %v570, 0.0
        %581 = vadd.xlane.f32.xlu0 %v580
        %v582 = vpop.xlane.xlu0 %581
        %v583 = vmul.f32 %v573, %v558
        %v584 = vmul.f32 %v576, %v558
        %v585 = vmul.f32 %v579, %v558
        %v586 = vmul.f32 %v582, %v558
        %v587 = vadd.f32 %v583, 1e-05
        %v588 = vadd.f32 %v584, 1e-05
        %v589 = vadd.f32 %v585, 1e-05
        %v590 = vadd.f32 %v586, 1e-05
        %v591 = vrsqrt.pop %v587
        %v592 = vrsqrt.pop %v588
        %v593 = vrsqrt.pop %v589
        %v594 = vrsqrt.pop %v590
        %v595 = vmul.f32 %v563, %v591
        %v596 = vmul.f32 %v564, %v592
        %v597 = vmul.f32 %v565, %v593
        %v598 = vmul.f32 %v566, %v594
        %v599 = vlaneseq
        %v600 = vshrl.u32 %v599, 7
        %v601 = vsub.s32 0, %v600
        %v602 = vrot.slane %v236, %v601
        %v603 = vmul.f32 %v595, %v602
        %v604 = vmul.f32 %v596, %v602
        %v605 = vmul.f32 %v597, %v602
        %v606 = vmul.f32 %v598, %v602
        %v607 = vlaneseq
        %v608 = vshrl.u32 %v607, 7
        %v609 = vsub.s32 0, %v608
        %v610 = vrot.slane %v237, %v609
        %v611 = vadd.f32 %v603, %v610
        %v612 = vadd.f32 %v604, %v610
        %v613 = vadd.f32 %v605, %v610
        %v614 = vadd.f32 %v606, %v610
        %v615 = vmax.f32 %v611, 0.0
        %v616 = vmax.f32 %v612, 0.0
        %v617 = vmax.f32 %v613, 0.0
        %v618 = vmax.f32 %v614, 0.0
        %v620 = vsel %vm343, %v615, 0
        %v623 = vsel %vm343, %v616, 0
        %v626 = vsel %vm343, %v617, 0
        %v629 = vsel %vm343, %v618, 0
        %631 = vmatprep.subr.mxu0 0.0
        %632 = vmatpush1.msra.mxu0 0.0
        %633 = vmatprep.subr.mxu0 0.0
        %634 = vmatpush1.msra.mxu0 0.0
        %635 = vmatprep.subr.mxu0 0.0
        %636 = vmatpush1.msra.mxu0 0.0
        %637 = vmatprep.subr.mxu0 0.0
        %638 = vmatpush1.msra.mxu0 0.0
        %639 = vmatprep.subr.mxu0 0.0
        %640 = vmatpush1.msra.mxu0 0.0
        %641 = vmatprep.subr.mxu0 0.0
        %642 = vmatpush1.msra.mxu0 0.0
        %643 = vmatprep.subr.mxu0 0.0
        %644 = vmatpush1.msra.mxu0 0.0
        %645 = vmatprep.subr.mxu0 0.0
        %646 = vmatpush1.msra.mxu0 0.0
        %647 = vmatprep.subr.mxu0 0.0
        %648 = vmatpush1.msra.mxu0 0.0
        %649 = vmatprep.subr.mxu0 0.0
        %650 = vmatpush1.msra.mxu0 0.0
        %651 = vmatprep.subr.mxu0 0.0
        %652 = vmatpush1.msra.mxu0 0.0
        %653 = vmatprep.subr.mxu0 0.0
        %654 = vmatpush1.msra.mxu0 0.0
        %655 = vmatprep.subr.mxu0 0.0
        %656 = vmatpush1.msra.mxu0 %v233
        %657 = vmatprep.subr.mxu0 0.0
        %658 = vmatpush1.msra.mxu0 %v232
        %659 = vmatprep.subr.mxu0 0.0
        %660 = vmatpush1.msra.mxu0 %v231
        %661 = vmatprep.subr.mxu0 0.0
        %662 = vmatpush1.msra.mxu0 %v230
        %663 = vmatprep.subr.mxu0 0.0
        %664 = vmatpush2.msra.mxu0 0.0
        %665 = vmatprep.subr.mxu0 0.0
        %666 = vmatpush2.msra.mxu0 0.0
        %667 = vmatprep.subr.mxu0 0.0
        %668 = vmatpush2.msra.mxu0 0.0
        %669 = vmatprep.subr.mxu0 0.0
        %670 = vmatpush2.msra.mxu0 0.0
        %671 = vmatprep.subr.mxu0 0.0
        %672 = vmatpush2.msra.mxu0 0.0
        %673 = vmatprep.subr.mxu0 0.0
        %674 = vmatpush2.msra.mxu0 0.0
        %675 = vmatprep.subr.mxu0 0.0
        %676 = vmatpush2.msra.mxu0 0.0
        %677 = vmatprep.subr.mxu0 0.0
        %678 = vmatpush2.msra.mxu0 0.0
        %679 = vmatprep.subr.mxu0 0.0
        %680 = vmatpush2.msra.mxu0 0.0
        %681 = vmatprep.subr.mxu0 0.0
        %682 = vmatpush2.msra.mxu0 0.0
        %683 = vmatprep.subr.mxu0 0.0
        %684 = vmatpush2.msra.mxu0 0.0
        %685 = vmatprep.subr.mxu0 0.0
        %686 = vmatpush2.msra.mxu0 0.0
        %687 = vmatprep.subr.mxu0 0.0
        %688 = vmatpush2.msra.mxu0 0.0
        %689 = vmatprep.subr.mxu0 0.0
        %690 = vmatpush2.msra.mxu0 0.0
        %691 = vmatprep.subr.mxu0 0.0
        %692 = vmatpush2.msra.mxu0 0.0
        %693 = vmatprep.subr.mxu0 0.0
        %694 = vmatpush2.msra.mxu0 0.0
        %695 = vmatprep.mubr.f32.mxu0 0.0
        %696 = vmatmul.mubr.f32.gmra.mxu0 %v620
        %v697 = vpop.f32.mrf.mxu0
        %v698 = vadd.f32 0.0, %v697
        %v699 = vpop.f32.mrf.mxu0
        %700 = vmatprep.mubr.f32.mxu0 0.0
        %701 = vmatmul.mubr.f32.gmra.mxu0 %v623
        %v702 = vpop.f32.mrf.mxu0
        %v703 = vadd.f32 0.0, %v702
        %v704 = vpop.f32.mrf.mxu0
        %705 = vmatprep.mubr.f32.mxu0 0.0
        %706 = vmatmul.mubr.f32.gmra.mxu0 %v626
        %v707 = vpop.f32.mrf.mxu0
        %v708 = vadd.f32 0.0, %v707
        %v709 = vpop.f32.mrf.mxu0
        %710 = vmatprep.mubr.f32.mxu0 0.0
        %711 = vmatmul.mubr.f32.gmra.mxu0 %v629
        %v712 = vpop.f32.mrf.mxu0
        %v713 = vadd.f32 0.0, %v712
        %v714 = vpop.f32.mrf.mxu0
        %715 = vdwg.mxu0
        %v716 = vlaneseq
        %v717 = vshrl.u32 %v716, 7
        %v718 = vsub.s32 0, %v717
        %v719 = vrot.slane %v238, %v718
        %720 = vmatprep.subr.mxu0 0.0
        %721 = vmatpush1.msra.mxu0 0.0
        %722 = vmatprep.subr.mxu0 0.0
        %723 = vmatpush1.msra.mxu0 0.0
        %724 = vmatprep.subr.mxu0 0.0
        %725 = vmatpush1.msra.mxu0 0.0
        %726 = vmatprep.subr.mxu0 0.0
        %727 = vmatpush1.msra.mxu0 0.0
        %728 = vmatprep.subr.mxu0 0.0
        %729 = vmatpush1.msra.mxu0 0.0
        %730 = vmatprep.subr.mxu0 0.0
        %731 = vmatpush1.msra.mxu0 0.0
        %732 = vmatprep.subr.mxu0 0.0
        %733 = vmatpush1.msra.mxu0 0.0
        %734 = vmatprep.subr.mxu0 0.0
        %735 = vmatpush1.msra.mxu0 0.0
        %736 = vmatprep.subr.mxu0 0.0
        %737 = vmatpush1.msra.mxu0 0.0
        %738 = vmatprep.subr.mxu0 0.0
        %739 = vmatpush1.msra.mxu0 0.0
        %740 = vmatprep.subr.mxu0 0.0
        %741 = vmatpush1.msra.mxu0 0.0
        %742 = vmatprep.subr.mxu0 0.0
        %743 = vmatpush1.msra.mxu0 0.0
        %744 = vmatprep.subr.mxu0 0.0
        %745 = vmatpush1.msra.mxu0 %v713
        %746 = vmatprep.subr.mxu0 0.0
        %747 = vmatpush1.msra.mxu0 %v708
        %748 = vmatprep.subr.mxu0 0.0
        %749 = vmatpush1.msra.mxu0 %v703
        %750 = vmatprep.subr.mxu0 0.0
        %751 = vmatpush1.msra.mxu0 %v698
        %752 = vmatprep.subr.mxu0 0.0
        %753 = vmatpush2.msra.mxu0 0.0
        %754 = vmatprep.subr.mxu0 0.0
        %755 = vmatpush2.msra.mxu0 0.0
        %756 = vmatprep.subr.mxu0 0.0
        %757 = vmatpush2.msra.mxu0 0.0
        %758 = vmatprep.subr.mxu0 0.0
        %759 = vmatpush2.msra.mxu0 0.0
        %760 = vmatprep.subr.mxu0 0.0
        %761 = vmatpush2.msra.mxu0 0.0
        %762 = vmatprep.subr.mxu0 0.0
        %763 = vmatpush2.msra.mxu0 0.0
        %764 = vmatprep.subr.mxu0 0.0
        %765 = vmatpush2.msra.mxu0 0.0
        %766 = vmatprep.subr.mxu0 0.0
        %767 = vmatpush2.msra.mxu0 0.0
        %768 = vmatprep.subr.mxu0 0.0
        %769 = vmatpush2.msra.mxu0 0.0
        %770 = vmatprep.subr.mxu0 0.0
        %771 = vmatpush2.msra.mxu0 0.0
        %772 = vmatprep.subr.mxu0 0.0
        %773 = vmatpush2.msra.mxu0 0.0
        %774 = vmatprep.subr.mxu0 0.0
        %775 = vmatpush2.msra.mxu0 0.0
        %776 = vmatprep.subr.mxu0 0.0
        %777 = vmatpush2.msra.mxu0 0.0
        %778 = vmatprep.subr.mxu0 0.0
        %779 = vmatpush2.msra.mxu0 0.0
        %780 = vmatprep.subr.mxu0 0.0
        %781 = vmatpush2.msra.mxu0 0.0
        %782 = vmatprep.subr.mxu0 0.0
        %783 = vmatpush2.msra.mxu0 0.0
        %784 = vmatprep.mubr.f32.mxu0 0.0
        %785 = vmatmul.mubr.f32.gmra.mxu0 %v345
        %v786 = vpop.f32.mrf.mxu0
        %v787 = vadd.f32 %v719, %v786
        %v788 = vpop.f32.mrf.mxu0
        %789 = vmatprep.mubr.f32.mxu0 0.0
        %790 = vmatmul.mubr.f32.gmra.mxu0 %v348
        %v791 = vpop.f32.mrf.mxu0
        %v792 = vadd.f32 %v719, %v791
        %v793 = vpop.f32.mrf.mxu0
        %794 = vmatprep.mubr.f32.mxu0 0.0
        %795 = vmatmul.mubr.f32.gmra.mxu0 %v351
        %v796 = vpop.f32.mrf.mxu0
        %v797 = vadd.f32 %v719, %v796
        %v798 = vpop.f32.mrf.mxu0
        %799 = vmatprep.mubr.f32.mxu0 0.0
        %800 = vmatmul.mubr.f32.gmra.mxu0 %v354
        %v801 = vpop.f32.mrf.mxu0
        %v802 = vadd.f32 %v719, %v801
        %v803 = vpop.f32.mrf.mxu0
        %804 = vdwg.mxu0
        %v805 = vmax.f32 %v787, 0.0
        %v806 = vmax.f32 %v792, 0.0
        %v807 = vmax.f32 %v797, 0.0
        %v808 = vmax.f32 %v802, 0.0
        %v809 = vlaneseq
        %v810 = vshrl.u32 %v809, 7
        %v811 = vlaneseq
        %v812 = vand.u32 %v811, 127
        %v813 = vmul.u32 %v810, 8
        %vm814 = vcmp.ge.s32.totalorder %v812, %v813
        %v815 = vadd.s32 %v813, 8
        %vm816 = vcmp.lt.s32.totalorder %v812, %v815
        %vm817 = vmand %vm814, %vm816
        %v818 = vsel %vm817, 1.0, 0.0
        %v820 = vsel %vm343, %v818, 0
        %822 = vmatprep.subr.mxu0 0.0
        %823 = vmatpush1.msra.mxu0 0.0
        %824 = vmatprep.subr.mxu0 0.0
        %825 = vmatpush1.msra.mxu0 0.0
        %826 = vmatprep.subr.mxu0 0.0
        %827 = vmatpush1.msra.mxu0 0.0
        %828 = vmatprep.subr.mxu0 0.0
        %829 = vmatpush1.msra.mxu0 0.0
        %830 = vmatprep.subr.mxu0 0.0
        %831 = vmatpush1.msra.mxu0 0.0
        %832 = vmatprep.subr.mxu0 0.0
        %833 = vmatpush1.msra.mxu0 0.0
        %834 = vmatprep.subr.mxu0 0.0
        %835 = vmatpush1.msra.mxu0 0.0
        %836 = vmatprep.subr.mxu0 0.0
        %837 = vmatpush1.msra.mxu0 0.0
        %838 = vmatprep.subr.mxu0 0.0
        %839 = vmatpush1.msra.mxu0 0.0
        %840 = vmatprep.subr.mxu0 0.0
        %841 = vmatpush1.msra.mxu0 0.0
        %842 = vmatprep.subr.mxu0 0.0
        %843 = vmatpush1.msra.mxu0 0.0
        %844 = vmatprep.subr.mxu0 0.0
        %845 = vmatpush1.msra.mxu0 0.0
        %846 = vmatprep.subr.mxu0 0.0
        %847 = vmatpush1.msra.mxu0 %v808
        %848 = vmatprep.subr.mxu0 0.0
        %849 = vmatpush1.msra.mxu0 %v807
        %850 = vmatprep.subr.mxu0 0.0
        %851 = vmatpush1.msra.mxu0 %v806
        %852 = vmatprep.subr.mxu0 0.0
        %853 = vmatpush1.msra.mxu0 %v805
        %854 = vmatprep.subr.mxu0 0.0
        %855 = vmatpush2.msra.mxu0 0.0
        %856 = vmatprep.subr.mxu0 0.0
        %857 = vmatpush2.msra.mxu0 0.0
        %858 = vmatprep.subr.mxu0 0.0
        %859 = vmatpush2.msra.mxu0 0.0
        %860 = vmatprep.subr.mxu0 0.0
        %861 = vmatpush2.msra.mxu0 0.0
        %862 = vmatprep.subr.mxu0 0.0
        %863 = vmatpush2.msra.mxu0 0.0
        %864 = vmatprep.subr.mxu0 0.0
        %865 = vmatpush2.msra.mxu0 0.0
        %866 = vmatprep.subr.mxu0 0.0
        %867 = vmatpush2.msra.mxu0 0.0
        %868 = vmatprep.subr.mxu0 0.0
        %869 = vmatpush2.msra.mxu0 0.0
        %870 = vmatprep.subr.mxu0 0.0
        %871 = vmatpush2.msra.mxu0 0.0
        %872 = vmatprep.subr.mxu0 0.0
        %873 = vmatpush2.msra.mxu0 0.0
        %874 = vmatprep.subr.mxu0 0.0
        %875 = vmatpush2.msra.mxu0 0.0
        %876 = vmatprep.subr.mxu0 0.0
        %877 = vmatpush2.msra.mxu0 0.0
        %878 = vmatprep.subr.mxu0 0.0
        %879 = vmatpush2.msra.mxu0 0.0
        %880 = vmatprep.subr.mxu0 0.0
        %881 = vmatpush2.msra.mxu0 0.0
        %882 = vmatprep.subr.mxu0 0.0
        %883 = vmatpush2.msra.mxu0 0.0
        %884 = vmatprep.subr.mxu0 0.0
        %885 = vmatpush2.msra.mxu0 0.0
        %886 = vmatprep.mubr.f32.mxu0 0.0
        %887 = vmatmul.mubr.f32.gmra.mxu0 %v820
        %v888 = vpop.f32.mrf.mxu0
        %v889 = vadd.f32 0.0, %v888
        %v890 = vpop.f32.mrf.mxu0
        %891 = vdwg.mxu0
        %v892 = vmul.f32 %v889, 0.125
        %v893 = vlaneseq
        %v894 = vshrl.u32 %v893, 7
        %v895 = vsub.s32 0, %v894
        %v896 = vrot.slane %v239, %v895
        %v897 = vmul.f32 %v892, %v896
        %v898 = vmul.f32 %v240, 0.03125
        %v899 = vlaneseq
        %v900 = vshrl.u32 %v899, 7
        %v901 = vsub.s32 0, %v900
        %v902 = vrot.slane %v898, %v901
        %v903 = vadd.f32 %v897, %v902
        %vm904 = vcmask 257024
        %v905 = vsel %vm904, %v903, 0.0
        %906 = vadd.xlane.f32.xlu0 %v905
        %v907 = vpop.xlane.xlu0 %906
        %908 = vst [vmem:[%s205] sm:$0xf] %v907
        %s909 = sand.u32 %s120, 1
        %s910 = scalar_lea.sflag [#allocation3], %s909
        %s911 = sand.u32 %s120, 1
        %s912 = smul.addr %s911, 4
        %s913 = scalar_lea.vmem [#allocation2], %s912
        // Predicated region
        $region37: #{tpu_custom_call.1} parent=35 // pred_check
          %p914 = pneg %p130
        $region38: #{tpu_custom_call.1} parent=35 // pred_check_branch
          %916 = sbr.rel (%p914) target = $region40
        $region39: #{tpu_custom_call.1} parent=35 // pred_region
          %s918 = ssub.s32 64, 64
          %919 = vsyncadd %s910, %s918
          %s920 = smul.addr %s18, 64
          %s921 = scalar_lea.hbm %s4, %s920
          %s923 = sshll.u32 %s913, 4
          %s924 = int_to_ptr.vmem [resolvable:$true] %s923
          %926 = dma.vmem_to_hbm [thread:$0]  %s924, 64, %s921, %s910
        $region40: #{tpu_custom_call.1} parent=35 // pred_fallthru
          _
      $region36: #{tpu_custom_call.1} parent=5 // pred_fallthru
        _
      %p927 = scmp.le.s32.totalorder 2, %s13
      // Predicated region
      $region41: #{tpu_custom_call.1} parent=5 // pred_check
        %p928 = pneg %p927
      $region42: #{tpu_custom_call.1} parent=5 // pred_check_branch
        %930 = sbr.rel (%p928) target = $region44
      $region43: #{tpu_custom_call.1} parent=5 // pred_region
        %s931 = ssub.s32 %s13, 2
        // Predicated region
        $region45: #{tpu_custom_call.1} parent=43 // pred_check
          %p932 = pneg %p136
        $region46: #{tpu_custom_call.1} parent=43 // pred_check_branch
          %934 = sbr.rel (%p932) target = $region48
        $region47: #{tpu_custom_call.1} parent=43 // pred_region
          %s935 = sand.u32 %s121, 1
          %s936 = scalar_lea.sflag [#allocation3], %s935
          %s937 = sand.u32 %s121, 1
          %s938 = smul.addr %s937, 4
          %s939 = scalar_lea.vmem [#allocation2], %s938
          %940 = dma.done %s936, 64
        $region48: #{tpu_custom_call.1} parent=43 // pred_fallthru
          _
      $region44: #{tpu_custom_call.1} parent=5 // pred_fallthru
        _
    $region6: #{tpu_custom_call.1} parent=1 // loop_footer
      %s17 = sadd.s32 1, %s13
    $region7: #{tpu_custom_call.1} parent=1 // loop_footer_branch
      %12 = sbr.rel target = $region3
    $region8: #{tpu_custom_call.1} parent=1 // loop_exit
      _
    %941 = vsyncpa [#allocation3], 1
    %s942 = scalar_lea.sflag [#allocation3], 1
    %943 = vsyncpa %s942, 1

</llo_original>
